<compile_context>
chip_gen: v6e
topology: v6e:2x2x1
jax: 0.10.0
libtpu: 0.0.40
codegen_flags: <defaults>
</compile_context>

<pallas_src>
import jax
import jax.numpy as jnp
from jax.experimental import pallas as pl
from jax.experimental.pallas import tpu as pltpu

LEAKY_SLOPE = 0.01  # F.leaky_relu default negative_slope


def _round_up(x, m):
    return ((x + m - 1) // m) * m


def mlp_kernel(x_ref, w1_ref, b1_ref, w2_ref, b2_ref, o_ref):
    # x_ref: (TB, IN_P) bf16 ; w1_ref: (IN_P, HID_P) bf16 ; b1_ref: (1, HID_P) f32
    # w2_ref: (HID_P, OUT_P) bf16 ; b2_ref: (1, OUT_P) f32 ; o_ref: (TB, OUT_P) f32
    z1 = jnp.dot(x_ref[...], w1_ref[...],
                 preferred_element_type=jnp.float32) + b1_ref[...]     # (TB, HID_P) f32
    a1 = jnp.where(z1 > 0, z1, LEAKY_SLOPE * z1)                       # leaky_relu
    # dropout (eval mode) == identity
    z2 = jnp.dot(a1.astype(jnp.bfloat16), w2_ref[...],
                 preferred_element_type=jnp.float32) + b2_ref[...]     # (TB, OUT_P) f32
    # sigmoid: exp -> EUP, approx reciprocal -> EUP (keeps the VALU slots free)
    o_ref[...] = pl.reciprocal(1.0 + jnp.exp(-z2), approx=True).astype(o_ref.dtype)


def prepare_params(w1, b1, w2, b2):
    """One-time weight prep (call at model setup, not per forward):
    transpose to (in,hid)/(hid,out), zero-pad feature dims to multiples of 128,
    cast weights to bf16 (biases stay f32 for the f32 epilogue)."""
    hid_size, in_size = w1.shape
    out_size, _ = w2.shape
    in_p = _round_up(in_size, 128)
    hid_p = _round_up(hid_size, 128)
    out_p = _round_up(out_size, 128)

    w1_t = jnp.zeros((in_p, hid_p), jnp.bfloat16).at[:in_size, :hid_size].set(
        jnp.asarray(w1, jnp.float32).T.astype(jnp.bfloat16))
    w2_t = jnp.zeros((hid_p, out_p), jnp.bfloat16).at[:hid_size, :out_size].set(
        jnp.asarray(w2, jnp.float32).T.astype(jnp.bfloat16))
    b1_p = jnp.zeros((1, hid_p), jnp.float32).at[0, :hid_size].set(
        jnp.asarray(b1, jnp.float32))
    b2_p = jnp.zeros((1, out_p), jnp.float32).at[0, :out_size].set(
        jnp.asarray(b2, jnp.float32))

    return dict(w1=w1_t, b1=b1_p, w2=w2_t, b2=b2_p,
                in_size=in_size, hid_size=hid_size, out_size=out_size,
                in_p=in_p, hid_p=hid_p, out_p=out_p)


def _choose_block_b(batch, in_p, hid_p, out_p, budget_bytes=16 << 20):
    """Largest batch tile (<=512 rows, multiple of 8) such that the VMEM-resident
    weights plus the double-buffered x/out tiles and the z1 intermediate fit a
    conservative budget (well under v7x's 32 MiB scoped default)."""
    resident = 2 * (in_p * hid_p + hid_p * out_p) + 4 * (hid_p + out_p)   # bf16 W + f32 b
    per_row = 2 * (2 * in_p + 4 * out_p) + 4 * hid_p                      # 2x(x,out) + z1
    tb = 512
    while tb > 8 and resident + tb * per_row > budget_bytes:
        tb //= 2
    return min(tb, _round_up(batch, 8))


def simple_dense_nn_forward(x, params):
    """x: (B, in_size) float; params: output of prepare_params()."""
    B, in_size = x.shape
    assert in_size == params["in_size"]
    in_p, hid_p, out_p = params["in_p"], params["hid_p"], params["out_p"]
    out_size = params["out_size"]

    tb = _choose_block_b(B, in_p, hid_p, out_p)
    b_pad = _round_up(B, tb)
    n_b = b_pad // tb

    # Pad batch + input-feature dims; cast activations to bf16 for the MXU.
    x_p = jnp.zeros((b_pad, in_p), jnp.bfloat16).at[:B, :in_size].set(
        jnp.asarray(x, jnp.float32).astype(jnp.bfloat16))

    flops = 2 * b_pad * (in_p * hid_p + hid_p * out_p)
    bytes_accessed = (x_p.size * 2
                      + params["w1"].size * 2 + params["w2"].size * 2
                      + (params["b1"].size + params["b2"].size) * 4
                      + b_pad * out_p * 4)
    cost = pl.CostEstimate(flops=flops,
                           transcendentals=b_pad * out_p,
                           bytes_accessed=bytes_accessed)

    out_padded = pl.pallas_call(
        mlp_kernel,
        out_shape=jax.ShapeDtypeStruct((b_pad, out_p), jnp.float32),
        grid=(n_b,),
        in_specs=[
            pl.BlockSpec((tb, in_p), lambda i: (i, 0)),      # x: streamed per batch tile
            pl.BlockSpec((in_p, hid_p), lambda i: (0, 0)),   # W1: VMEM-resident
            pl.BlockSpec((1, hid_p), lambda i: (0, 0)),      # b1: VMEM-resident
            pl.BlockSpec((hid_p, out_p), lambda i: (0, 0)),  # W2: VMEM-resident
            pl.BlockSpec((1, out_p), lambda i: (0, 0)),      # b2: VMEM-resident
        ],
        out_specs=pl.BlockSpec((tb, out_p), lambda i: (i, 0)),
        compiler_params=pltpu.CompilerParams(
            dimension_semantics=("parallel",),               # shard batch across TCs (v7x)
            vmem_limit_bytes=32 << 20),
        cost_estimate=cost,
    )(x_p, params["w1"], params["b1"], params["w2"], params["b2"])

    return out_padded[:B, :out_size]


def _init_linear(key, out_features, in_features):
    # Match torch.nn.Linear default init: U(-1/sqrt(in), 1/sqrt(in)) for weight and bias.
    kw, kb = jax.random.split(key)
    bound = 1.0 / jnp.sqrt(jnp.float32(in_features))
    w = jax.random.uniform(kw, (out_features, in_features), jnp.float32, -bound, bound)
    b = jax.random.uniform(kb, (out_features,), jnp.float32, -bound, bound)
    return w, b


def _reference(x, w1, b1, w2, b2):
    z1 = x @ w1.T + b1
    a1 = jnp.where(z1 > 0, z1, LEAKY_SLOPE * z1)
    z2 = a1 @ w2.T + b2
    return jax.nn.sigmoid(z2)


if __name__ == "__main__":
    # Small shapes consistent with the module: batch=8, in_size=16, hid_size=32, out_size=4
    B, IN, HID, OUT = 8, 16, 32, 4
    key = jax.random.PRNGKey(0)
    kx, k1, k2 = jax.random.split(key, 3)

    x = jax.random.normal(kx, (B, IN), jnp.float32)
    w1, b1 = _init_linear(k1, HID, IN)
    w2, b2 = _init_linear(k2, OUT, HID)

    params = prepare_params(w1, b1, w2, b2)      # one-time setup (transpose/pad/cast)
    out = simple_dense_nn_forward(x, params)
    out = jax.block_until_ready(out)

    ref = _reference(x, w1, b1, w2, b2)
    assert out.shape == (B, OUT), out.shape
    # bf16 matmul inputs + approx reciprocal -> loosen tolerance vs the f32 reference.
    assert jnp.allclose(out, ref, atol=2e-2, rtol=2e-2), "mismatch vs reference"
    print("KERNEL_OK")
</pallas_src>

<mosaic_0001>
module attributes {stable_mosaic.version = 11 : i64} {
  func.func @mlp_kernel(%arg0: i32, %arg1: memref<8x128xbf16, #tpu.memory_space<vmem>>, %arg2: memref<128x128xbf16, #tpu.memory_space<vmem>>, %arg3: memref<1x128xf32, #tpu.memory_space<vmem>>, %arg4: memref<128x128xbf16, #tpu.memory_space<vmem>>, %arg5: memref<1x128xf32, #tpu.memory_space<vmem>>, %arg6: memref<8x128xf32, #tpu.memory_space<vmem>>) attributes {dimension_semantics = [#tpu.dimension_semantics<parallel>], iteration_bounds = array<i64: 1>, scalar_prefetch = 0 : i64, scratch_operands = 0 : i64, tpu.core_type = #tpu.core_type<tc>, window_params = [{transform_indices = @transform_0, window_bounds = array<i64: 8, 128>}, {pipeline_mode = #tpu.pipeline_mode<synchronous>, transform_indices = @transform_1, window_bounds = array<i64: 128, 128>}, {pipeline_mode = #tpu.pipeline_mode<synchronous>, transform_indices = @transform_2, window_bounds = array<i64: 1, 128>}, {pipeline_mode = #tpu.pipeline_mode<synchronous>, transform_indices = @transform_3, window_bounds = array<i64: 128, 128>}, {pipeline_mode = #tpu.pipeline_mode<synchronous>, transform_indices = @transform_4, window_bounds = array<i64: 1, 128>}, {transform_indices = @transform_5, window_bounds = array<i64: 8, 128>}]} {
    %c0 = arith.constant 0 : index
    %c0_0 = arith.constant 0 : index
    %0 = vector.load %arg1[%c0, %c0_0] : memref<8x128xbf16, #tpu.memory_space<vmem>>, vector<8x128xbf16>
    %c0_1 = arith.constant 0 : index
    %c0_2 = arith.constant 0 : index
    %1 = vector.load %arg2[%c0_1, %c0_2] : memref<128x128xbf16, #tpu.memory_space<vmem>>, vector<128x128xbf16>
    %cst = arith.constant dense<0.000000e+00> : vector<8x128xf32>
    %2 = tpu.matmul %0, %1, %cst {dimension_numbers = #tpu.dot_dimension_numbers<[1], [0], [0], [1], [0, 0, 1, 1], [], []>} : vector<8x128xbf16>, vector<128x128xbf16>, vector<8x128xf32> -> vector<8x128xf32>
    %c0_3 = arith.constant 0 : index
    %c0_4 = arith.constant 0 : index
    %3 = vector.load %arg3[%c0_3, %c0_4] : memref<1x128xf32, #tpu.memory_space<vmem>>, vector<1x128xf32>
    %4 = vector.broadcast %3 : vector<1x128xf32> to vector<8x128xf32>
    %5 = arith.addf %2, %4 : vector<8x128xf32>
    %cst_5 = arith.constant 0.000000e+00 : f32
    %6 = vector.broadcast %cst_5 : f32 to vector<8x128xf32>
    %7 = arith.cmpf ogt, %5, %6 : vector<8x128xf32>
    %cst_6 = arith.constant 0.00999999977 : f32
    %8 = vector.broadcast %cst_6 : f32 to vector<8x128xf32>
    %9 = arith.mulf %8, %5 : vector<8x128xf32>
    %10 = arith.select %7, %5, %9 : vector<8x128xi1>, vector<8x128xf32>
    %11 = arith.truncf %10 : vector<8x128xf32> to vector<8x128xbf16>
    %c0_7 = arith.constant 0 : index
    %c0_8 = arith.constant 0 : index
    %12 = vector.load %arg4[%c0_7, %c0_8] : memref<128x128xbf16, #tpu.memory_space<vmem>>, vector<128x128xbf16>
    %cst_9 = arith.constant dense<0.000000e+00> : vector<8x128xf32>
    %13 = tpu.matmul %11, %12, %cst_9 {dimension_numbers = #tpu.dot_dimension_numbers<[1], [0], [0], [1], [0, 0, 1, 1], [], []>} : vector<8x128xbf16>, vector<128x128xbf16>, vector<8x128xf32> -> vector<8x128xf32>
    %c0_10 = arith.constant 0 : index
    %c0_11 = arith.constant 0 : index
    %14 = vector.load %arg5[%c0_10, %c0_11] : memref<1x128xf32, #tpu.memory_space<vmem>>, vector<1x128xf32>
    %15 = vector.broadcast %14 : vector<1x128xf32> to vector<8x128xf32>
    %16 = arith.addf %13, %15 : vector<8x128xf32>
    %cst_12 = arith.constant 0.000000e+00 : f32
    %17 = vector.broadcast %cst_12 : f32 to vector<8x128xf32>
    %18 = arith.subf %17, %16 : vector<8x128xf32>
    %19 = math.exp %18 : vector<8x128xf32>
    %cst_13 = arith.constant 1.000000e+00 : f32
    %20 = vector.broadcast %cst_13 : f32 to vector<8x128xf32>
    %21 = arith.addf %20, %19 : vector<8x128xf32>
    %22 = tpu.reciprocal %21 {approx = true} : vector<8x128xf32> -> vector<8x128xf32>
    %c0_14 = arith.constant 0 : index
    %c0_15 = arith.constant 0 : index
    %23 = vector.load %arg6[%c0_14, %c0_15] : memref<8x128xf32, #tpu.memory_space<vmem>>, vector<8x128xf32>
    tpu.vector_store %arg6[%c0_14, %c0_15], %22 {strides = array<i32>} : memref<8x128xf32, #tpu.memory_space<vmem>>, vector<8x128xf32>,
    return
  }
  func.func @transform_0(%arg0: i32) -> (i32, i32) {
    %c0_i32 = arith.constant 0 : i32
    %c0_i32_0 = arith.constant 0 : i32
    return %arg0, %c0_i32 : i32, i32
  }
  func.func @transform_1(%arg0: i32) -> (i32, i32) {
    %c0_i32 = arith.constant 0 : i32
    %c0_i32_0 = arith.constant 0 : i32
    %c0_i32_1 = arith.constant 0 : i32
    return %c0_i32, %c0_i32_0 : i32, i32
  }
  func.func @transform_2(%arg0: i32) -> (i32, i32) {
    %c0_i32 = arith.constant 0 : i32
    %c0_i32_0 = arith.constant 0 : i32
    %c0_i32_1 = arith.constant 0 : i32
    return %c0_i32, %c0_i32_0 : i32, i32
  }
  func.func @transform_3(%arg0: i32) -> (i32, i32) {
    %c0_i32 = arith.constant 0 : i32
    %c0_i32_0 = arith.constant 0 : i32
    %c0_i32_1 = arith.constant 0 : i32
    return %c0_i32, %c0_i32_0 : i32, i32
  }
  func.func @transform_4(%arg0: i32) -> (i32, i32) {
    %c0_i32 = arith.constant 0 : i32
    %c0_i32_0 = arith.constant 0 : i32
    %c0_i32_1 = arith.constant 0 : i32
    return %c0_i32, %c0_i32_0 : i32, i32
  }
  func.func @transform_5(%arg0: i32) -> (i32, i32) {
    %c0_i32 = arith.constant 0 : i32
    %c0_i32_0 = arith.constant 0 : i32
    return %arg0, %c0_i32 : i32, i32
  }
}

</mosaic_0001>

<llo_original>
// kernel: tpu_custom_call.1
$region0: #{tpu_custom_call.1}
  #allocation0 [shape = 'u32[]', space=smem, size = 0x4, offset = 0x4, fixed_abs, tag = 'smem constant byte address 0x4 - core index']
  #allocation1 [shape = 'u32[144,128]{1,0:T(1,128)}', space=vmem, size = 0x12000, scoped, tag = 'internal scratch']
  %s0 = inlined_call_operand.hbm [shape: bf16[8,128], index: 0, kind: input, shape index: {}]
  %s1 = inlined_call_operand.hbm [shape: bf16[128,128], index: 1, kind: input, shape index: {}]
  %s2 = inlined_call_operand.vmem [shape: f32[1,128], index: 2, kind: input, shape index: {}]
  %s3 = inlined_call_operand.hbm [shape: bf16[128,128], index: 3, kind: input, shape index: {}]
  %s4 = inlined_call_operand.vmem [shape: f32[1,128], index: 4, kind: input, shape index: {}]
  %s5 = inlined_call_operand.hbm [shape: f32[8,128], index: 5, kind: output, shape index: {}]
  %s6 = sld [smem:[#allocation0]]
  $region42: #{tpu_custom_call.1} parent=0
    _
  %s8 = ssub.s32 1, %s6
  %s9 = scalar_select 0, %s8, %s6
  $region1: #{tpu_custom_call.1} parent=0
    #allocation2 [shape = 'u8[2048]{0}', space=vmem, size = 0x800, scoped, tag = 'input window, operand 0, single buffered']
    #allocation3 [shape = 's32[1]{0}', space=sflag, size = 0x4, scoped, tag = 'scoped memory for tpu_custom_call.1']
    #allocation4 [shape = 's32[1]{0}', space=sflag, size = 0x4, scoped, tag = 'scoped memory for tpu_custom_call.1']
    #allocation5 [shape = 'u8[32768]{0}', space=vmem, size = 0x8000, scoped, tag = 'input window, operand 1, single buffered']
    #allocation6 [shape = 's32[1]{0}', space=sflag, size = 0x4, scoped, tag = 'scoped memory for tpu_custom_call.1']
    #allocation7 [shape = 'u8[32768]{0}', space=vmem, size = 0x8000, scoped, tag = 'input window, operand 3, single buffered']
    #allocation8 [shape = 'u8[4096]{0}', space=vmem, size = 0x1000, scoped, tag = 'output window, operand 0, single buffered']
    %10 = vsyncpa [#allocation3], 0
    %11 = vsyncpa [#allocation6], 0
    %12 = vsyncpa [#allocation4], 0
    // Predicated region
    $region2: #{tpu_custom_call.1} parent=1 // pred_check
      _
    $region3: #{tpu_custom_call.1} parent=1 // pred_check_branch
      %14 = sbr.rel (0) target = $region5
    $region4: #{tpu_custom_call.1} parent=1 // pred_region
      %s16 = ssub.s32 64, 64
      %17 = vsyncadd [#allocation3], %s16
      %s19 = sshll.u32 [#allocation2], 4
      %s20 = int_to_ptr.vmem [resolvable:$true] %s19
      %22 = dma.hbm_to_vmem [thread:$0]  %s0, 64, %s20, [#allocation3]
    $region5: #{tpu_custom_call.1} parent=1 // pred_fallthru
      _
    // Predicated region
    $region6: #{tpu_custom_call.1} parent=1 // pred_check
      _
    $region7: #{tpu_custom_call.1} parent=1 // pred_check_branch
      %24 = sbr.rel (0) target = $region9
    $region8: #{tpu_custom_call.1} parent=1 // pred_region
      %s26 = ssub.s32 1024, 1024
      %27 = vsyncadd [#allocation6], %s26
      %s28 = sshll.u32 [#allocation5], 4
      %s29 = int_to_ptr.vmem [resolvable:$true] %s28
      %34 = dma.hbm_to_vmem [thread:$0]  %s1, 1024, %s29, [#allocation6], 64, 64, 4
    $region9: #{tpu_custom_call.1} parent=1 // pred_fallthru
      _
    // Predicated region
    $region10: #{tpu_custom_call.1} parent=1 // pred_check
      _
    $region11: #{tpu_custom_call.1} parent=1 // pred_check_branch
      %36 = sbr.rel (0) target = $region13
    $region12: #{tpu_custom_call.1} parent=1 // pred_region
      _
    $region13: #{tpu_custom_call.1} parent=1 // pred_fallthru
      _
    // Predicated region
    $region14: #{tpu_custom_call.1} parent=1 // pred_check
      _
    $region15: #{tpu_custom_call.1} parent=1 // pred_check_branch
      %38 = sbr.rel (0) target = $region17
    $region16: #{tpu_custom_call.1} parent=1 // pred_region
      %s40 = ssub.s32 1024, 1024
      %41 = vsyncadd [#allocation6], %s40
      %s42 = sshll.u32 [#allocation7], 4
      %s43 = int_to_ptr.vmem [resolvable:$true] %s42
      %48 = dma.hbm_to_vmem [thread:$0]  %s3, 1024, %s43, [#allocation6], 64, 64, 4
    $region17: #{tpu_custom_call.1} parent=1 // pred_fallthru
      _
    // Predicated region
    $region18: #{tpu_custom_call.1} parent=1 // pred_check
      _
    $region19: #{tpu_custom_call.1} parent=1 // pred_check_branch
      %50 = sbr.rel (0) target = $region21
    $region20: #{tpu_custom_call.1} parent=1 // pred_region
      _
    $region21: #{tpu_custom_call.1} parent=1 // pred_fallthru
      _
    // Predicated region
    $region22: #{tpu_custom_call.1} parent=1 // pred_check
      _
    $region23: #{tpu_custom_call.1} parent=1 // pred_check_branch
      %52 = sbr.rel (0) target = $region25
    $region24: #{tpu_custom_call.1} parent=1 // pred_region
      %53 = dma.done [#allocation3], 64
    $region25: #{tpu_custom_call.1} parent=1 // pred_fallthru
      _
    // Predicated region
    $region26: #{tpu_custom_call.1} parent=1 // pred_check
      _
    $region27: #{tpu_custom_call.1} parent=1 // pred_check_branch
      %55 = sbr.rel (0) target = $region29
    $region28: #{tpu_custom_call.1} parent=1 // pred_region
      %56 = dma.done [#allocation6], 1024
    $region29: #{tpu_custom_call.1} parent=1 // pred_fallthru
      _
    // Predicated region
    $region30: #{tpu_custom_call.1} parent=1 // pred_check
      _
    $region31: #{tpu_custom_call.1} parent=1 // pred_check_branch
      %58 = sbr.rel (0) target = $region33
    $region32: #{tpu_custom_call.1} parent=1 // pred_region
      %59 = dma.done [#allocation6], 1024
    $region33: #{tpu_custom_call.1} parent=1 // pred_fallthru
      _
    %v61 = vld [vmem:[#allocation2] sm:$0xf]
    %v62 = vld [vmem:[#allocation5] sm:$0xf]
    %v63 = vld [vmem:[#allocation5 + $0x4] sm:$0xf]
    %v64 = vld [vmem:[#allocation5 + $0x8] sm:$0xf]
    %v65 = vld [vmem:[#allocation5 + $0xc] sm:$0xf]
    %v66 = vld [vmem:[#allocation5 + $0x10] sm:$0xf]
    %v67 = vld [vmem:[#allocation5 + $0x14] sm:$0xf]
    %v68 = vld [vmem:[#allocation5 + $0x18] sm:$0xf]
    %v69 = vld [vmem:[#allocation5 + $0x1c] sm:$0xf]
    %v70 = vld [vmem:[#allocation5 + $0x20] sm:$0xf]
    %v71 = vld [vmem:[#allocation5 + $0x24] sm:$0xf]
    %v72 = vld [vmem:[#allocation5 + $0x28] sm:$0xf]
    %v73 = vld [vmem:[#allocation5 + $0x2c] sm:$0xf]
    %v74 = vld [vmem:[#allocation5 + $0x30] sm:$0xf]
    %v75 = vld [vmem:[#allocation5 + $0x34] sm:$0xf]
    %v76 = vld [vmem:[#allocation5 + $0x38] sm:$0xf]
    %v77 = vld [vmem:[#allocation5 + $0x3c] sm:$0xf]
    %v78 = vld [vmem:[%s2] sm:$0x1]
    %v80 = vlaneseq
    %v81 = vshrl.u32 %v80, 7
    %v82 = vsub.s32 0, %v81
    %v83 = vrot.slane %v78, %v82
    %v101 = vunpack.c.l.b16 %v62
    %v102 = vunpack.c.l.b16 %v63
    %v103 = vunpack.c.l.b16 %v64
    %v104 = vunpack.c.l.b16 %v65
    %v105 = vunpack.c.l.b16 %v66
    %v106 = vunpack.c.l.b16 %v67
    %v107 = vunpack.c.l.b16 %v68
    %v108 = vunpack.c.l.b16 %v69
    %v109 = vunpack.c.l.b16 %v70
    %v110 = vunpack.c.l.b16 %v71
    %v111 = vunpack.c.l.b16 %v72
    %v112 = vunpack.c.l.b16 %v73
    %v113 = vunpack.c.l.b16 %v74
    %v114 = vunpack.c.l.b16 %v75
    %v115 = vunpack.c.l.b16 %v76
    %v116 = vunpack.c.l.b16 %v77
    %v117 = vpack.c.b16 %v102, %v101
    %v118 = vpack.c.b16 %v104, %v103
    %v119 = vpack.c.b16 %v106, %v105
    %v120 = vpack.c.b16 %v108, %v107
    %v121 = vpack.c.b16 %v110, %v109
    %v122 = vpack.c.b16 %v112, %v111
    %v123 = vpack.c.b16 %v114, %v113
    %v124 = vpack.c.b16 %v116, %v115
    %133 = vmatprep.subr.bf16.mxu0 0
    %134 = vmatpush1.bf16.msra.mxu0 %v124
    %135 = vmatprep.subr.bf16.mxu0 0
    %136 = vmatpush1.bf16.msra.mxu0 %v123
    %137 = vmatprep.subr.bf16.mxu0 0
    %138 = vmatpush1.bf16.msra.mxu0 %v122
    %139 = vmatprep.subr.bf16.mxu0 0
    %140 = vmatpush1.bf16.msra.mxu0 %v121
    %141 = vmatprep.subr.bf16.mxu0 0
    %142 = vmatpush1.bf16.msra.mxu0 %v120
    %143 = vmatprep.subr.bf16.mxu0 0
    %144 = vmatpush1.bf16.msra.mxu0 %v119
    %145 = vmatprep.subr.bf16.mxu0 0
    %146 = vmatpush1.bf16.msra.mxu0 %v118
    %147 = vmatprep.subr.bf16.mxu0 0
    %148 = vmatpush1.bf16.msra.mxu0 %v117
    %149 = vmatprep.subr.bf16.mxu0 0
    %150 = vmatpush2.bf16.msra.mxu0 0
    %151 = vmatprep.subr.bf16.mxu0 0
    %152 = vmatpush2.bf16.msra.mxu0 0
    %153 = vmatprep.subr.bf16.mxu0 0
    %154 = vmatpush2.bf16.msra.mxu0 0
    %155 = vmatprep.subr.bf16.mxu0 0
    %156 = vmatpush2.bf16.msra.mxu0 0
    %157 = vmatprep.subr.bf16.mxu0 0
    %158 = vmatpush2.bf16.msra.mxu0 0
    %159 = vmatprep.subr.bf16.mxu0 0
    %160 = vmatpush2.bf16.msra.mxu0 0
    %161 = vmatprep.subr.bf16.mxu0 0
    %162 = vmatpush2.bf16.msra.mxu0 0
    %163 = vmatprep.subr.bf16.mxu0 0
    %164 = vmatpush2.bf16.msra.mxu0 0
    %165 = vmatprep.mubr.bf16.mxu0 0
    %166 = vmatmul.mubr.bf16.gmra.mxu0 %v61
    %v167 = vpop.f32.mrf.mxu0
    %v168 = vadd.f32 %v83, %v167
    %v169 = vpop.f32.mrf.mxu0
    %v170 = vpop.f32.mrf.mxu0
    %v171 = vpop.f32.mrf.mxu0
    %172 = vdwg.mxu0
    %vm173 = vcmp.gt.f32.partialorder %v168, 0.0
    %v174 = vmul.f32 %v168, 0.01
    %v175 = vsel %vm173, %v168, %v174
    %v176 = vpack.c.bf16 %v175, %v175
    %v177 = vld [vmem:[#allocation7] sm:$0xf]
    %v178 = vld [vmem:[#allocation7 + $0x4] sm:$0xf]
    %v179 = vld [vmem:[#allocation7 + $0x8] sm:$0xf]
    %v180 = vld [vmem:[#allocation7 + $0xc] sm:$0xf]
    %v181 = vld [vmem:[#allocation7 + $0x10] sm:$0xf]
    %v182 = vld [vmem:[#allocation7 + $0x14] sm:$0xf]
    %v183 = vld [vmem:[#allocation7 + $0x18] sm:$0xf]
    %v184 = vld [vmem:[#allocation7 + $0x1c] sm:$0xf]
    %v185 = vld [vmem:[#allocation7 + $0x20] sm:$0xf]
    %v186 = vld [vmem:[#allocation7 + $0x24] sm:$0xf]
    %v187 = vld [vmem:[#allocation7 + $0x28] sm:$0xf]
    %v188 = vld [vmem:[#allocation7 + $0x2c] sm:$0xf]
    %v189 = vld [vmem:[#allocation7 + $0x30] sm:$0xf]
    %v190 = vld [vmem:[#allocation7 + $0x34] sm:$0xf]
    %v191 = vld [vmem:[#allocation7 + $0x38] sm:$0xf]
    %v192 = vld [vmem:[#allocation7 + $0x3c] sm:$0xf]
    %v193 = vld [vmem:[%s4] sm:$0x1]
    %v195 = vlaneseq
    %v196 = vshrl.u32 %v195, 7
    %v197 = vsub.s32 0, %v196
    %v198 = vrot.slane %v193, %v197
    %v216 = vunpack.c.l.b16 %v177
    %v217 = vunpack.c.l.b16 %v178
    %v218 = vunpack.c.l.b16 %v179
    %v219 = vunpack.c.l.b16 %v180
    %v220 = vunpack.c.l.b16 %v181
    %v221 = vunpack.c.l.b16 %v182
    %v222 = vunpack.c.l.b16 %v183
    %v223 = vunpack.c.l.b16 %v184
    %v224 = vunpack.c.l.b16 %v185
    %v225 = vunpack.c.l.b16 %v186
    %v226 = vunpack.c.l.b16 %v187
    %v227 = vunpack.c.l.b16 %v188
    %v228 = vunpack.c.l.b16 %v189
    %v229 = vunpack.c.l.b16 %v190
    %v230 = vunpack.c.l.b16 %v191
    %v231 = vunpack.c.l.b16 %v192
    %v232 = vpack.c.b16 %v217, %v216
    %v233 = vpack.c.b16 %v219, %v218
    %v234 = vpack.c.b16 %v221, %v220
    %v235 = vpack.c.b16 %v223, %v222
    %v236 = vpack.c.b16 %v225, %v224
    %v237 = vpack.c.b16 %v227, %v226
    %v238 = vpack.c.b16 %v229, %v228
    %v239 = vpack.c.b16 %v231, %v230
    %248 = vmatprep.subr.bf16.mxu0 0
    %249 = vmatpush1.bf16.msra.mxu0 %v239
    %250 = vmatprep.subr.bf16.mxu0 0
    %251 = vmatpush1.bf16.msra.mxu0 %v238
    %252 = vmatprep.subr.bf16.mxu0 0
    %253 = vmatpush1.bf16.msra.mxu0 %v237
    %254 = vmatprep.subr.bf16.mxu0 0
    %255 = vmatpush1.bf16.msra.mxu0 %v236
    %256 = vmatprep.subr.bf16.mxu0 0
    %257 = vmatpush1.bf16.msra.mxu0 %v235
    %258 = vmatprep.subr.bf16.mxu0 0
    %259 = vmatpush1.bf16.msra.mxu0 %v234
    %260 = vmatprep.subr.bf16.mxu0 0
    %261 = vmatpush1.bf16.msra.mxu0 %v233
    %262 = vmatprep.subr.bf16.mxu0 0
    %263 = vmatpush1.bf16.msra.mxu0 %v232
    %264 = vmatprep.subr.bf16.mxu0 0
    %265 = vmatpush2.bf16.msra.mxu0 0
    %266 = vmatprep.subr.bf16.mxu0 0
    %267 = vmatpush2.bf16.msra.mxu0 0
    %268 = vmatprep.subr.bf16.mxu0 0
    %269 = vmatpush2.bf16.msra.mxu0 0
    %270 = vmatprep.subr.bf16.mxu0 0
    %271 = vmatpush2.bf16.msra.mxu0 0
    %272 = vmatprep.subr.bf16.mxu0 0
    %273 = vmatpush2.bf16.msra.mxu0 0
    %274 = vmatprep.subr.bf16.mxu0 0
    %275 = vmatpush2.bf16.msra.mxu0 0
    %276 = vmatprep.subr.bf16.mxu0 0
    %277 = vmatpush2.bf16.msra.mxu0 0
    %278 = vmatprep.subr.bf16.mxu0 0
    %279 = vmatpush2.bf16.msra.mxu0 0
    %280 = vmatprep.mubr.bf16.mxu0 0
    %281 = vmatmul.mubr.bf16.gmra.mxu0 %v176
    %v282 = vpop.f32.mrf.mxu0
    %v283 = vadd.f32 %v198, %v282
    %v284 = vpop.f32.mrf.mxu0
    %v285 = vpop.f32.mrf.mxu0
    %v286 = vpop.f32.mrf.mxu0
    %287 = vdwg.mxu0
    %v288 = vsub.f32 0.0, %v283
    %v289 = vmul.f32 %v288, 1.442695
    %v290 = vpow.pop %v289
    %v291 = vadd.f32 %v290, 1.0
    %v292 = vrcp.pop %v291
    %293 = vst [vmem:[#allocation8] sm:$0xff] %v292
    // Predicated region
    $region34: #{tpu_custom_call.1} parent=1 // pred_check
      _
    $region35: #{tpu_custom_call.1} parent=1 // pred_check_branch
      %295 = sbr.rel (0) target = $region37
    $region36: #{tpu_custom_call.1} parent=1 // pred_region
      %s297 = ssub.s32 128, 128
      %298 = vsyncadd [#allocation4], %s297
      %s300 = sshll.u32 [#allocation8], 4
      %s301 = int_to_ptr.vmem [resolvable:$true] %s300
      %303 = dma.vmem_to_hbm [thread:$0]  %s301, 128, %s5, [#allocation4]
    $region37: #{tpu_custom_call.1} parent=1 // pred_fallthru
      _
    // Predicated region
    $region38: #{tpu_custom_call.1} parent=1 // pred_check
      _
    $region39: #{tpu_custom_call.1} parent=1 // pred_check_branch
      %305 = sbr.rel (0) target = $region41
    $region40: #{tpu_custom_call.1} parent=1 // pred_region
      %306 = dma.done [#allocation4], 128
    $region41: #{tpu_custom_call.1} parent=1 // pred_fallthru
      _
    %307 = vsyncpa [#allocation3], 1
    %308 = vsyncpa [#allocation6], 1
    %309 = vsyncpa [#allocation4], 1

</llo_original>
